<compile_context>
chip_gen: v7x
topology: tpu7x:2x2x1
jax: 0.10.0
libtpu: 0.0.40
codegen_flags: <defaults>
</compile_context>

<pallas_src>
import math

import jax
import jax.numpy as jnp
from jax.experimental import pallas as pl
from jax.experimental.pallas import tpu as pltpu


def _round_up(x, m):
    return ((x + m - 1) // m) * m


# ----------------------------- kernels --------------------------------------


def _conv_mm_kernel_fused(p_ref, w_ref, b_ref, o_ref):
    """Single-K-tile path: one MXU GEMM + bias add + cast, no scratch."""
    acc = jnp.dot(p_ref[...], w_ref[...], preferred_element_type=jnp.float32)
    o_ref[...] = (acc + b_ref[...]).astype(o_ref.dtype)


def _conv_mm_kernel_acc(p_ref, w_ref, b_ref, o_ref, acc_ref):
    """K-tiled path: f32 accumulator resident across the reduction axis."""
    k = pl.program_id(1)

    @pl.when(k == 0)
    def _():
        acc_ref[...] = jnp.zeros_like(acc_ref)

    acc_ref[...] += jnp.dot(p_ref[...], w_ref[...],
                            preferred_element_type=jnp.float32)

    @pl.when(k == pl.num_programs(1) - 1)
    def _():
        o_ref[...] = (acc_ref[...] + b_ref[...]).astype(o_ref.dtype)


# ----------------------------- wrapper ---------------------------------------


def _im2col(x, K):
    """F.unfold-compatible patch extraction (valid, stride 1).

    x: (N, C, H, W) -> (N*Ho*Wo, C*K*K) with column order (C, Kh, Kw),
    matching weight.reshape(Cout, C*K*K). Wrapper-side layout plumbing.
    """
    N, C, H, W = x.shape
    Ho, Wo = H - K + 1, W - K + 1
    rows = []
    for i in range(K):
        cols = [x[:, :, i:i + Ho, j:j + Wo] for j in range(K)]  # each (N,C,Ho,Wo)
        rows.append(jnp.stack(cols, axis=2))                     # (N,C,Kw,Ho,Wo)
    patches = jnp.stack(rows, axis=2)                            # (N,C,Kh,Kw,Ho,Wo)
    patches = patches.transpose(0, 4, 5, 1, 2, 3)                # (N,Ho,Wo,C,Kh,Kw)
    return patches.reshape(N * Ho * Wo, C * K * K), Ho, Wo


def my_conv2d(x, weight, bias):
    """Pallas equivalent of MyConv2dFunction.forward."""
    N, Cin, Hin, Win = x.shape
    Cout, Cin2, Kh, Kw = weight.shape
    assert Cin == Cin2 and Kh == Kw, "shape mismatch"
    K = Kh
    Ho, Wo = Hin - K + 1, Win - K + 1
    M = N * Ho * Wo           # im2col rows
    Kc = Cin * K * K          # contraction length

    patches, _, _ = _im2col(x, K)             # (M, Kc)
    w_mat = weight.reshape(Cout, Kc).T        # (Kc, Cout): one-time wrapper transpose

    # MXU / lane-dense padding.
    Kp = _round_up(Kc, 128)
    Np = _round_up(Cout, 128)
    tm = min(512, _round_up(M, 8))            # big row tile to amortize per-step cost
    Mp = _round_up(M, tm)
    tk = min(Kp, 1024)                        # contraction tile (multiple of 128)
    n_k = Kp // tk

    p_pad = jnp.zeros((Mp, Kp), x.dtype).at[:M, :Kc].set(patches)
    w_pad = jnp.zeros((Kp, Np), weight.dtype).at[:Kc, :Cout].set(w_mat)
    b_pad = jnp.zeros((1, Np), bias.dtype).at[0, :Cout].set(bias)

    if n_k == 1:
        # Whole contraction fits in one tile: fused GEMM, no accumulator scratch.
        out = pl.pallas_call(
            _conv_mm_kernel_fused,
            out_shape=jax.ShapeDtypeStruct((Mp, Np), x.dtype),
            grid=(Mp // tm,),
            in_specs=[
                pl.BlockSpec((tm, Kp), lambda i: (i, 0)),   # im2col rows, tiled over M
                pl.BlockSpec((Kp, Np), lambda i: (0, 0)),   # weight: resident
                pl.BlockSpec((1, Np), lambda i: (0, 0)),    # bias: resident
            ],
            out_specs=pl.BlockSpec((tm, Np), lambda i: (i, 0)),
            compiler_params=pltpu.CompilerParams(
                dimension_semantics=("parallel",),
            ),
        )(p_pad, w_pad, b_pad)
    else:
        # Large contraction: tile K as trailing "arbitrary" axis, f32 accumulator.
        out = pl.pallas_call(
            _conv_mm_kernel_acc,
            out_shape=jax.ShapeDtypeStruct((Mp, Np), x.dtype),
            grid=(Mp // tm, n_k),
            in_specs=[
                pl.BlockSpec((tm, tk), lambda i, k: (i, k)),
                pl.BlockSpec((tk, Np), lambda i, k: (k, 0)),
                pl.BlockSpec((1, Np), lambda i, k: (0, 0)),
            ],
            out_specs=pl.BlockSpec((tm, Np), lambda i, k: (i, 0)),
            scratch_shapes=[pltpu.VMEM((tm, Np), jnp.float32)],
            compiler_params=pltpu.CompilerParams(
                dimension_semantics=("parallel", "arbitrary"),
            ),
        )(p_pad, w_pad, b_pad)

    out = out[:M, :Cout]                                # strip padding
    return out.reshape(N, Ho, Wo, Cout).transpose(0, 3, 1, 2)


def init_params(key, in_channels, out_channels, kernel_size, dtype=jnp.float32):
    """Mirror MyConv2dModule.reset_parameters:
    kaiming_uniform_(a=sqrt(5)) -> U(-1/sqrt(fan_in), 1/sqrt(fan_in)), same for bias."""
    kw, kb = jax.random.split(key)
    fan_in = in_channels * kernel_size * kernel_size
    bound = 1.0 / math.sqrt(fan_in)
    weight = jax.random.uniform(
        kw, (out_channels, in_channels, kernel_size, kernel_size),
        dtype, minval=-bound, maxval=bound)
    bias = jax.random.uniform(kb, (out_channels,), dtype, minval=-bound, maxval=bound)
    return weight, bias


if __name__ == "__main__":
    batch, in_ch, out_ch, ksize, hw = 2, 4, 8, 3, 16

    key = jax.random.PRNGKey(0)
    kx, kp = jax.random.split(key)
    x = jax.random.normal(kx, (batch, in_ch, hw, hw), jnp.float32)
    weight, bias = init_params(kp, in_ch, out_ch, ksize)

    out = jax.block_until_ready(my_conv2d(x, weight, bias))

    # Reference: plain XLA conv (cross-correlation, like PyTorch conv2d).
    ref = jax.lax.conv_general_dilated(
        x, weight, window_strides=(1, 1), padding="VALID",
        dimension_numbers=("NCHW", "OIHW", "NCHW"),
    ) + bias.reshape(1, -1, 1, 1)

    assert out.shape == (batch, out_ch, hw - ksize + 1, hw - ksize + 1)
    assert jnp.allclose(out, ref, atol=1e-4, rtol=1e-4), "mismatch vs reference"

    print("KERNEL_OK")
</pallas_src>

<mosaic_0001>
module attributes {stable_mosaic.version = 11 : i64} {
  func.func @_conv_mm_kernel_fused(%arg0: i32, %arg1: memref<392x128xf32, #tpu.memory_space<vmem>>, %arg2: memref<128x128xf32, #tpu.memory_space<vmem>>, %arg3: memref<1x128xf32, #tpu.memory_space<vmem>>, %arg4: memref<392x128xf32, #tpu.memory_space<vmem>>) attributes {dimension_semantics = [#tpu.dimension_semantics<parallel>], iteration_bounds = array<i64: 1>, scalar_prefetch = 0 : i64, scratch_operands = 0 : i64, tpu.core_type = #tpu.core_type<tc>, window_params = [{transform_indices = @transform_0, window_bounds = array<i64: 392, 128>}, {pipeline_mode = #tpu.pipeline_mode<synchronous>, transform_indices = @transform_1, window_bounds = array<i64: 128, 128>}, {pipeline_mode = #tpu.pipeline_mode<synchronous>, transform_indices = @transform_2, window_bounds = array<i64: 1, 128>}, {transform_indices = @transform_3, window_bounds = array<i64: 392, 128>}]} {
    %c0 = arith.constant 0 : index
    %c0_0 = arith.constant 0 : index
    %0 = vector.load %arg1[%c0, %c0_0] : memref<392x128xf32, #tpu.memory_space<vmem>>, vector<392x128xf32>
    %c0_1 = arith.constant 0 : index
    %c0_2 = arith.constant 0 : index
    %1 = vector.load %arg2[%c0_1, %c0_2] : memref<128x128xf32, #tpu.memory_space<vmem>>, vector<128x128xf32>
    %cst = arith.constant dense<0.000000e+00> : vector<392x128xf32>
    %2 = tpu.matmul %0, %1, %cst {dimension_numbers = #tpu.dot_dimension_numbers<[1], [0], [0], [1], [0, 0, 1, 1], [], []>} : vector<392x128xf32>, vector<128x128xf32>, vector<392x128xf32> -> vector<392x128xf32>
    %c0_3 = arith.constant 0 : index
    %c0_4 = arith.constant 0 : index
    %3 = vector.load %arg3[%c0_3, %c0_4] : memref<1x128xf32, #tpu.memory_space<vmem>>, vector<1x128xf32>
    %4 = vector.broadcast %3 : vector<1x128xf32> to vector<392x128xf32>
    %5 = arith.addf %2, %4 : vector<392x128xf32>
    %c0_5 = arith.constant 0 : index
    %c0_6 = arith.constant 0 : index
    %6 = vector.load %arg4[%c0_5, %c0_6] : memref<392x128xf32, #tpu.memory_space<vmem>>, vector<392x128xf32>
    tpu.vector_store %arg4[%c0_5, %c0_6], %5 {strides = array<i32>} : memref<392x128xf32, #tpu.memory_space<vmem>>, vector<392x128xf32>,
    return
  }
  func.func @transform_0(%arg0: i32) -> (i32, i32) {
    %c0_i32 = arith.constant 0 : i32
    %c0_i32_0 = arith.constant 0 : i32
    return %arg0, %c0_i32 : i32, i32
  }
  func.func @transform_1(%arg0: i32) -> (i32, i32) {
    %c0_i32 = arith.constant 0 : i32
    %c0_i32_0 = arith.constant 0 : i32
    %c0_i32_1 = arith.constant 0 : i32
    return %c0_i32, %c0_i32_0 : i32, i32
  }
  func.func @transform_2(%arg0: i32) -> (i32, i32) {
    %c0_i32 = arith.constant 0 : i32
    %c0_i32_0 = arith.constant 0 : i32
    %c0_i32_1 = arith.constant 0 : i32
    return %c0_i32, %c0_i32_0 : i32, i32
  }
  func.func @transform_3(%arg0: i32) -> (i32, i32) {
    %c0_i32 = arith.constant 0 : i32
    %c0_i32_0 = arith.constant 0 : i32
    return %arg0, %c0_i32 : i32, i32
  }
}

</mosaic_0001>

<llo_original>
// kernel: tpu_custom_call.1
$region0: #{tpu_custom_call.1}
  #allocation0 [shape = 'u32[]', space=smem, size = 0x4, offset = 0x4, fixed_abs, tag = 'smem constant byte address 0x4 - core index']
  #allocation1 [shape = 'u32[144,128]{1,0:T(1,128)}', space=vmem, size = 0x12000, scoped, tag = 'internal scratch']
  %s0 = inlined_call_operand.hbm [shape: f32[392,128], index: 0, kind: input, shape index: {}]
  %s1 = inlined_call_operand.hbm [shape: f32[128,128], index: 1, kind: input, shape index: {}]
  %s2 = inlined_call_operand.vmem [shape: f32[1,128], index: 2, kind: input, shape index: {}]
  %s3 = inlined_call_operand.hbm [shape: f32[392,128], index: 3, kind: output, shape index: {}]
  %s4 = sld [smem:[#allocation0]]
  $region30: #{tpu_custom_call.1} parent=0
    _
  %s6 = ssub.s32 1, %s4
  %s7 = scalar_select 0, %s6, %s4
  $region1: #{tpu_custom_call.1} parent=0
    #allocation2 [shape = 'u8[200704]{0}', space=vmem, size = 0x31000, scoped, tag = 'input window, operand 0, single buffered']
    #allocation3 [shape = 's32[1]{0}', space=sflag, size = 0x4, scoped, tag = 'scoped memory for tpu_custom_call.1']
    #allocation4 [shape = 's32[1]{0}', space=sflag, size = 0x4, scoped, tag = 'scoped memory for tpu_custom_call.1']
    #allocation5 [shape = 'u8[65536]{0}', space=vmem, size = 0x10000, scoped, tag = 'input window, operand 1, single buffered']
    #allocation6 [shape = 's32[1]{0}', space=sflag, size = 0x4, scoped, tag = 'scoped memory for tpu_custom_call.1']
    #allocation7 [shape = 'u8[200704]{0}', space=vmem, size = 0x31000, scoped, tag = 'output window, operand 0, single buffered']
    %8 = vsyncpa [#allocation3], 0
    %9 = vsyncpa [#allocation6], 0
    %10 = vsyncpa [#allocation4], 0
    // Predicated region
    $region2: #{tpu_custom_call.1} parent=1 // pred_check
      _
    $region3: #{tpu_custom_call.1} parent=1 // pred_check_branch
      %12 = sbr.rel (0) target = $region5
    $region4: #{tpu_custom_call.1} parent=1 // pred_region
      %s14 = ssub.s32 6272, 6272
      %15 = vsyncadd [#allocation3], %s14
      %s16 = sshll.u32 [#allocation2], 4
      %s17 = int_to_ptr.vmem [resolvable:$true] %s16
      %22 = dma.hbm_to_vmem [thread:$0]  %s0, 6272, %s17, [#allocation3], 128, 128, 8
    $region5: #{tpu_custom_call.1} parent=1 // pred_fallthru
      _
    // Predicated region
    $region6: #{tpu_custom_call.1} parent=1 // pred_check
      _
    $region7: #{tpu_custom_call.1} parent=1 // pred_check_branch
      %24 = sbr.rel (0) target = $region9
    $region8: #{tpu_custom_call.1} parent=1 // pred_region
      %s26 = ssub.s32 2048, 2048
      %27 = vsyncadd [#allocation6], %s26
      %s28 = sshll.u32 [#allocation5], 4
      %s29 = int_to_ptr.vmem [resolvable:$true] %s28
      %34 = dma.hbm_to_vmem [thread:$0]  %s1, 2048, %s29, [#allocation6], 128, 128, 8
    $region9: #{tpu_custom_call.1} parent=1 // pred_fallthru
      _
    // Predicated region
    $region10: #{tpu_custom_call.1} parent=1 // pred_check
      _
    $region11: #{tpu_custom_call.1} parent=1 // pred_check_branch
      %36 = sbr.rel (0) target = $region13
    $region12: #{tpu_custom_call.1} parent=1 // pred_region
      _
    $region13: #{tpu_custom_call.1} parent=1 // pred_fallthru
      _
    // Predicated region
    $region14: #{tpu_custom_call.1} parent=1 // pred_check
      _
    $region15: #{tpu_custom_call.1} parent=1 // pred_check_branch
      %38 = sbr.rel (0) target = $region17
    $region16: #{tpu_custom_call.1} parent=1 // pred_region
      %39 = dma.done [#allocation3], 6272
    $region17: #{tpu_custom_call.1} parent=1 // pred_fallthru
      _
    // Predicated region
    $region18: #{tpu_custom_call.1} parent=1 // pred_check
      _
    $region19: #{tpu_custom_call.1} parent=1 // pred_check_branch
      %41 = sbr.rel (0) target = $region21
    $region20: #{tpu_custom_call.1} parent=1 // pred_region
      %42 = dma.done [#allocation6], 2048
    $region21: #{tpu_custom_call.1} parent=1 // pred_fallthru
      _
    %v43 = vld [vmem:[#allocation2] sm:$0xff]
    %v44 = vld [vmem:[#allocation2 + $0x8] sm:$0xff]
    %v45 = vld [vmem:[#allocation2 + $0x10] sm:$0xff]
    %v46 = vld [vmem:[#allocation2 + $0x18] sm:$0xff]
    %v47 = vld [vmem:[#allocation2 + $0x20] sm:$0xff]
    %v48 = vld [vmem:[#allocation2 + $0x28] sm:$0xff]
    %v49 = vld [vmem:[#allocation2 + $0x30] sm:$0xff]
    %v50 = vld [vmem:[#allocation2 + $0x38] sm:$0xff]
    %v51 = vld [vmem:[#allocation2 + $0x40] sm:$0xff]
    %v52 = vld [vmem:[#allocation2 + $0x48] sm:$0xff]
    %v53 = vld [vmem:[#allocation2 + $0x50] sm:$0xff]
    %v54 = vld [vmem:[#allocation2 + $0x58] sm:$0xff]
    %v55 = vld [vmem:[#allocation2 + $0x60] sm:$0xff]
    %v56 = vld [vmem:[#allocation2 + $0x68] sm:$0xff]
    %v57 = vld [vmem:[#allocation2 + $0x70] sm:$0xff]
    %v58 = vld [vmem:[#allocation2 + $0x78] sm:$0xff]
    %v59 = vld [vmem:[#allocation2 + $0x80] sm:$0xff]
    %v60 = vld [vmem:[#allocation2 + $0x88] sm:$0xff]
    %v61 = vld [vmem:[#allocation2 + $0x90] sm:$0xff]
    %v62 = vld [vmem:[#allocation2 + $0x98] sm:$0xff]
    %v63 = vld [vmem:[#allocation2 + $0xa0] sm:$0xff]
    %v64 = vld [vmem:[#allocation2 + $0xa8] sm:$0xff]
    %v65 = vld [vmem:[#allocation2 + $0xb0] sm:$0xff]
    %v66 = vld [vmem:[#allocation2 + $0xb8] sm:$0xff]
    %v67 = vld [vmem:[#allocation2 + $0xc0] sm:$0xff]
    %v68 = vld [vmem:[#allocation2 + $0xc8] sm:$0xff]
    %v69 = vld [vmem:[#allocation2 + $0xd0] sm:$0xff]
    %v70 = vld [vmem:[#allocation2 + $0xd8] sm:$0xff]
    %v71 = vld [vmem:[#allocation2 + $0xe0] sm:$0xff]
    %v72 = vld [vmem:[#allocation2 + $0xe8] sm:$0xff]
    %v73 = vld [vmem:[#allocation2 + $0xf0] sm:$0xff]
    %v74 = vld [vmem:[#allocation2 + $0xf8] sm:$0xff]
    %v75 = vld [vmem:[#allocation2 + $0x100] sm:$0xff]
    %v76 = vld [vmem:[#allocation2 + $0x108] sm:$0xff]
    %v77 = vld [vmem:[#allocation2 + $0x110] sm:$0xff]
    %v78 = vld [vmem:[#allocation2 + $0x118] sm:$0xff]
    %v79 = vld [vmem:[#allocation2 + $0x120] sm:$0xff]
    %v80 = vld [vmem:[#allocation2 + $0x128] sm:$0xff]
    %v81 = vld [vmem:[#allocation2 + $0x130] sm:$0xff]
    %v82 = vld [vmem:[#allocation2 + $0x138] sm:$0xff]
    %v83 = vld [vmem:[#allocation2 + $0x140] sm:$0xff]
    %v84 = vld [vmem:[#allocation2 + $0x148] sm:$0xff]
    %v85 = vld [vmem:[#allocation2 + $0x150] sm:$0xff]
    %v86 = vld [vmem:[#allocation2 + $0x158] sm:$0xff]
    %v87 = vld [vmem:[#allocation2 + $0x160] sm:$0xff]
    %v88 = vld [vmem:[#allocation2 + $0x168] sm:$0xff]
    %v89 = vld [vmem:[#allocation2 + $0x170] sm:$0xff]
    %v90 = vld [vmem:[#allocation2 + $0x178] sm:$0xff]
    %v91 = vld [vmem:[#allocation2 + $0x180] sm:$0xff]
    %v92 = vld [vmem:[#allocation5] sm:$0xff]
    %v93 = vld [vmem:[#allocation5 + $0x8] sm:$0xff]
    %v94 = vld [vmem:[#allocation5 + $0x10] sm:$0xff]
    %v95 = vld [vmem:[#allocation5 + $0x18] sm:$0xff]
    %v96 = vld [vmem:[#allocation5 + $0x20] sm:$0xff]
    %v97 = vld [vmem:[#allocation5 + $0x28] sm:$0xff]
    %v98 = vld [vmem:[#allocation5 + $0x30] sm:$0xff]
    %v99 = vld [vmem:[#allocation5 + $0x38] sm:$0xff]
    %v100 = vld [vmem:[#allocation5 + $0x40] sm:$0xff]
    %v101 = vld [vmem:[#allocation5 + $0x48] sm:$0xff]
    %v102 = vld [vmem:[#allocation5 + $0x50] sm:$0xff]
    %v103 = vld [vmem:[#allocation5 + $0x58] sm:$0xff]
    %v104 = vld [vmem:[#allocation5 + $0x60] sm:$0xff]
    %v105 = vld [vmem:[#allocation5 + $0x68] sm:$0xff]
    %v106 = vld [vmem:[#allocation5 + $0x70] sm:$0xff]
    %v107 = vld [vmem:[#allocation5 + $0x78] sm:$0xff]
    %v108 = vld [vmem:[%s2] sm:$0x1]
    %v110 = vlaneseq
    %v111 = vshrl.u32 %v110, 7
    %v112 = vsub.s32 0, %v111
    %v113 = vrot.slane %v108, %v112
    %115 = vmatprep.subr.mxu0 0.0
    %116 = vmatpush1.msra.mxu0 %v92
    %117 = vmatprep.subr.mxu0 0.0
    %118 = vmatpush1.msra.mxu0 %v93
    %119 = vmatprep.subr.mxu0 0.0
    %120 = vmatpush1.msra.mxu0 %v94
    %121 = vmatprep.subr.mxu0 0.0
    %122 = vmatpush1.msra.mxu0 %v95
    %123 = vmatprep.subr.mxu0 0.0
    %124 = vmatpush1.msra.mxu0 %v96
    %125 = vmatprep.subr.mxu0 0.0
    %126 = vmatpush1.msra.mxu0 %v97
    %127 = vmatprep.subr.mxu0 0.0
    %128 = vmatpush1.msra.mxu0 %v98
    %129 = vmatprep.subr.mxu0 0.0
    %130 = vmatpush1.msra.mxu0 %v99
    %131 = vmatprep.subr.mxu0 0.0
    %132 = vmatpush1.msra.mxu0 %v100
    %133 = vmatprep.subr.mxu0 0.0
    %134 = vmatpush1.msra.mxu0 %v101
    %135 = vmatprep.subr.mxu0 0.0
    %136 = vmatpush1.msra.mxu0 %v102
    %137 = vmatprep.subr.mxu0 0.0
    %138 = vmatpush1.msra.mxu0 %v103
    %139 = vmatprep.subr.mxu0 0.0
    %140 = vmatpush1.msra.mxu0 %v104
    %141 = vmatprep.subr.mxu0 0.0
    %142 = vmatpush1.msra.mxu0 %v105
    %143 = vmatprep.subr.mxu0 0.0
    %144 = vmatpush1.msra.mxu0 %v106
    %145 = vmatprep.subr.mxu0 0.0
    %146 = vmatpush1.msra.mxu0 %v107
    %147 = vmatprep.subr.mxu0 0.0
    %148 = vmatpush1.msra.mxu0 0.0
    %149 = vmatprep.subr.mxu0 0.0
    %150 = vmatpush1.msra.mxu0 0.0
    %151 = vmatprep.subr.mxu0 0.0
    %152 = vmatpush1.msra.mxu0 0.0
    %153 = vmatprep.subr.mxu0 0.0
    %154 = vmatpush1.msra.mxu0 0.0
    %155 = vmatprep.subr.mxu0 0.0
    %156 = vmatpush1.msra.mxu0 0.0
    %157 = vmatprep.subr.mxu0 0.0
    %158 = vmatpush1.msra.mxu0 0.0
    %159 = vmatprep.subr.mxu0 0.0
    %160 = vmatpush1.msra.mxu0 0.0
    %161 = vmatprep.subr.mxu0 0.0
    %162 = vmatpush1.msra.mxu0 0.0
    %163 = vmatprep.subr.mxu0 0.0
    %164 = vmatpush1.msra.mxu0 0.0
    %165 = vmatprep.subr.mxu0 0.0
    %166 = vmatpush1.msra.mxu0 0.0
    %167 = vmatprep.subr.mxu0 0.0
    %168 = vmatpush1.msra.mxu0 0.0
    %169 = vmatprep.subr.mxu0 0.0
    %170 = vmatpush1.msra.mxu0 0.0
    %171 = vmatprep.subr.mxu0 0.0
    %172 = vmatpush1.msra.mxu0 0.0
    %173 = vmatprep.subr.mxu0 0.0
    %174 = vmatpush1.msra.mxu0 0.0
    %175 = vmatprep.subr.mxu0 0.0
    %176 = vmatpush1.msra.mxu0 0.0
    %177 = vmatprep.subr.mxu0 0.0
    %178 = vmatpush1.msra.mxu0 0.0
    %179 = vmatprep.mubr.f32.mxu0 0.0
    %180 = vmatmul.mubr.f32.gmra.mrb[0].mxu0 %v43
    %v181 = vpop.f32.mrb[0].mxu0
    %v182 = vadd.f32 %v113, %v181
    %v183 = vpop.f32.mrb[0].mxu0
    %184 = vmatprep.mubr.f32.mxu0 0.0
    %185 = vmatmul.mubr.f32.gmra.mrb[0].mxu0 %v44
    %v186 = vpop.f32.mrb[0].mxu0
    %v187 = vadd.f32 %v113, %v186
    %v188 = vpop.f32.mrb[0].mxu0
    %189 = vmatprep.mubr.f32.mxu0 0.0
    %190 = vmatmul.mubr.f32.gmra.mrb[0].mxu0 %v45
    %v191 = vpop.f32.mrb[0].mxu0
    %v192 = vadd.f32 %v113, %v191
    %v193 = vpop.f32.mrb[0].mxu0
    %194 = vmatprep.mubr.f32.mxu0 0.0
    %195 = vmatmul.mubr.f32.gmra.mrb[0].mxu0 %v46
    %v196 = vpop.f32.mrb[0].mxu0
    %v197 = vadd.f32 %v113, %v196
    %v198 = vpop.f32.mrb[0].mxu0
    %199 = vmatprep.mubr.f32.mxu0 0.0
    %200 = vmatmul.mubr.f32.gmra.mrb[0].mxu0 %v47
    %v201 = vpop.f32.mrb[0].mxu0
    %v202 = vadd.f32 %v113, %v201
    %v203 = vpop.f32.mrb[0].mxu0
    %204 = vmatprep.mubr.f32.mxu0 0.0
    %205 = vmatmul.mubr.f32.gmra.mrb[0].mxu0 %v48
    %v206 = vpop.f32.mrb[0].mxu0
    %v207 = vadd.f32 %v113, %v206
    %v208 = vpop.f32.mrb[0].mxu0
    %209 = vmatprep.mubr.f32.mxu0 0.0
    %210 = vmatmul.mubr.f32.gmra.mrb[0].mxu0 %v49
    %v211 = vpop.f32.mrb[0].mxu0
    %v212 = vadd.f32 %v113, %v211
    %v213 = vpop.f32.mrb[0].mxu0
    %214 = vmatprep.mubr.f32.mxu0 0.0
    %215 = vmatmul.mubr.f32.gmra.mrb[0].mxu0 %v50
    %v216 = vpop.f32.mrb[0].mxu0
    %v217 = vadd.f32 %v113, %v216
    %v218 = vpop.f32.mrb[0].mxu0
    %219 = vmatprep.mubr.f32.mxu0 0.0
    %220 = vmatmul.mubr.f32.gmra.mrb[0].mxu0 %v51
    %v221 = vpop.f32.mrb[0].mxu0
    %v222 = vadd.f32 %v113, %v221
    %v223 = vpop.f32.mrb[0].mxu0
    %224 = vmatprep.mubr.f32.mxu0 0.0
    %225 = vmatmul.mubr.f32.gmra.mrb[0].mxu0 %v52
    %v226 = vpop.f32.mrb[0].mxu0
    %v227 = vadd.f32 %v113, %v226
    %v228 = vpop.f32.mrb[0].mxu0
    %229 = vmatprep.mubr.f32.mxu0 0.0
    %230 = vmatmul.mubr.f32.gmra.mrb[0].mxu0 %v53
    %v231 = vpop.f32.mrb[0].mxu0
    %v232 = vadd.f32 %v113, %v231
    %v233 = vpop.f32.mrb[0].mxu0
    %234 = vmatprep.mubr.f32.mxu0 0.0
    %235 = vmatmul.mubr.f32.gmra.mrb[0].mxu0 %v54
    %v236 = vpop.f32.mrb[0].mxu0
    %v237 = vadd.f32 %v113, %v236
    %v238 = vpop.f32.mrb[0].mxu0
    %239 = vmatprep.mubr.f32.mxu0 0.0
    %240 = vmatmul.mubr.f32.gmra.mrb[0].mxu0 %v55
    %v241 = vpop.f32.mrb[0].mxu0
    %v242 = vadd.f32 %v113, %v241
    %v243 = vpop.f32.mrb[0].mxu0
    %244 = vmatprep.mubr.f32.mxu0 0.0
    %245 = vmatmul.mubr.f32.gmra.mrb[0].mxu0 %v56
    %v246 = vpop.f32.mrb[0].mxu0
    %v247 = vadd.f32 %v113, %v246
    %v248 = vpop.f32.mrb[0].mxu0
    %249 = vmatprep.mubr.f32.mxu0 0.0
    %250 = vmatmul.mubr.f32.gmra.mrb[0].mxu0 %v57
    %v251 = vpop.f32.mrb[0].mxu0
    %v252 = vadd.f32 %v113, %v251
    %v253 = vpop.f32.mrb[0].mxu0
    %254 = vmatprep.mubr.f32.mxu0 0.0
    %255 = vmatmul.mubr.f32.gmra.mrb[0].mxu0 %v58
    %v256 = vpop.f32.mrb[0].mxu0
    %v257 = vadd.f32 %v113, %v256
    %v258 = vpop.f32.mrb[0].mxu0
    %259 = vmatprep.mubr.f32.mxu0 0.0
    %260 = vmatmul.mubr.f32.gmra.mrb[0].mxu0 %v59
    %v261 = vpop.f32.mrb[0].mxu0
    %v262 = vadd.f32 %v113, %v261
    %v263 = vpop.f32.mrb[0].mxu0
    %264 = vmatprep.mubr.f32.mxu0 0.0
    %265 = vmatmul.mubr.f32.gmra.mrb[0].mxu0 %v60
    %v266 = vpop.f32.mrb[0].mxu0
    %v267 = vadd.f32 %v113, %v266
    %v268 = vpop.f32.mrb[0].mxu0
    %269 = vmatprep.mubr.f32.mxu0 0.0
    %270 = vmatmul.mubr.f32.gmra.mrb[0].mxu0 %v61
    %v271 = vpop.f32.mrb[0].mxu0
    %v272 = vadd.f32 %v113, %v271
    %v273 = vpop.f32.mrb[0].mxu0
    %274 = vmatprep.mubr.f32.mxu0 0.0
    %275 = vmatmul.mubr.f32.gmra.mrb[0].mxu0 %v62
    %v276 = vpop.f32.mrb[0].mxu0
    %v277 = vadd.f32 %v113, %v276
    %v278 = vpop.f32.mrb[0].mxu0
    %279 = vmatprep.mubr.f32.mxu0 0.0
    %280 = vmatmul.mubr.f32.gmra.mrb[0].mxu0 %v63
    %v281 = vpop.f32.mrb[0].mxu0
    %v282 = vadd.f32 %v113, %v281
    %v283 = vpop.f32.mrb[0].mxu0
    %284 = vmatprep.mubr.f32.mxu0 0.0
    %285 = vmatmul.mubr.f32.gmra.mrb[0].mxu0 %v64
    %v286 = vpop.f32.mrb[0].mxu0
    %v287 = vadd.f32 %v113, %v286
    %v288 = vpop.f32.mrb[0].mxu0
    %289 = vmatprep.mubr.f32.mxu0 0.0
    %290 = vmatmul.mubr.f32.gmra.mrb[0].mxu0 %v65
    %v291 = vpop.f32.mrb[0].mxu0
    %v292 = vadd.f32 %v113, %v291
    %v293 = vpop.f32.mrb[0].mxu0
    %294 = vmatprep.mubr.f32.mxu0 0.0
    %295 = vmatmul.mubr.f32.gmra.mrb[0].mxu0 %v66
    %v296 = vpop.f32.mrb[0].mxu0
    %v297 = vadd.f32 %v113, %v296
    %v298 = vpop.f32.mrb[0].mxu0
    %299 = vmatprep.mubr.f32.mxu0 0.0
    %300 = vmatmul.mubr.f32.gmra.mrb[0].mxu0 %v67
    %v301 = vpop.f32.mrb[0].mxu0
    %v302 = vadd.f32 %v113, %v301
    %v303 = vpop.f32.mrb[0].mxu0
    %304 = vmatprep.mubr.f32.mxu0 0.0
    %305 = vmatmul.mubr.f32.gmra.mrb[0].mxu0 %v68
    %v306 = vpop.f32.mrb[0].mxu0
    %v307 = vadd.f32 %v113, %v306
    %v308 = vpop.f32.mrb[0].mxu0
    %309 = vmatprep.mubr.f32.mxu0 0.0
    %310 = vmatmul.mubr.f32.gmra.mrb[0].mxu0 %v69
    %v311 = vpop.f32.mrb[0].mxu0
    %v312 = vadd.f32 %v113, %v311
    %v313 = vpop.f32.mrb[0].mxu0
    %314 = vmatprep.mubr.f32.mxu0 0.0
    %315 = vmatmul.mubr.f32.gmra.mrb[0].mxu0 %v70
    %v316 = vpop.f32.mrb[0].mxu0
    %v317 = vadd.f32 %v113, %v316
    %v318 = vpop.f32.mrb[0].mxu0
    %319 = vmatprep.mubr.f32.mxu0 0.0
    %320 = vmatmul.mubr.f32.gmra.mrb[0].mxu0 %v71
    %v321 = vpop.f32.mrb[0].mxu0
    %v322 = vadd.f32 %v113, %v321
    %v323 = vpop.f32.mrb[0].mxu0
    %324 = vmatprep.mubr.f32.mxu0 0.0
    %325 = vmatmul.mubr.f32.gmra.mrb[0].mxu0 %v72
    %v326 = vpop.f32.mrb[0].mxu0
    %v327 = vadd.f32 %v113, %v326
    %v328 = vpop.f32.mrb[0].mxu0
    %329 = vmatprep.mubr.f32.mxu0 0.0
    %330 = vmatmul.mubr.f32.gmra.mrb[0].mxu0 %v73
    %v331 = vpop.f32.mrb[0].mxu0
    %v332 = vadd.f32 %v113, %v331
    %v333 = vpop.f32.mrb[0].mxu0
    %334 = vmatprep.mubr.f32.mxu0 0.0
    %335 = vmatmul.mubr.f32.gmra.mrb[0].mxu0 %v74
    %v336 = vpop.f32.mrb[0].mxu0
    %v337 = vadd.f32 %v113, %v336
    %v338 = vpop.f32.mrb[0].mxu0
    %339 = vmatprep.mubr.f32.mxu0 0.0
    %340 = vmatmul.mubr.f32.gmra.mrb[0].mxu0 %v75
    %v341 = vpop.f32.mrb[0].mxu0
    %v342 = vadd.f32 %v113, %v341
    %v343 = vpop.f32.mrb[0].mxu0
    %344 = vmatprep.mubr.f32.mxu0 0.0
    %345 = vmatmul.mubr.f32.gmra.mrb[0].mxu0 %v76
    %v346 = vpop.f32.mrb[0].mxu0
    %v347 = vadd.f32 %v113, %v346
    %v348 = vpop.f32.mrb[0].mxu0
    %349 = vmatprep.mubr.f32.mxu0 0.0
    %350 = vmatmul.mubr.f32.gmra.mrb[0].mxu0 %v77
    %v351 = vpop.f32.mrb[0].mxu0
    %v352 = vadd.f32 %v113, %v351
    %v353 = vpop.f32.mrb[0].mxu0
    %354 = vmatprep.mubr.f32.mxu0 0.0
    %355 = vmatmul.mubr.f32.gmra.mrb[0].mxu0 %v78
    %v356 = vpop.f32.mrb[0].mxu0
    %v357 = vadd.f32 %v113, %v356
    %v358 = vpop.f32.mrb[0].mxu0
    %359 = vmatprep.mubr.f32.mxu0 0.0
    %360 = vmatmul.mubr.f32.gmra.mrb[0].mxu0 %v79
    %v361 = vpop.f32.mrb[0].mxu0
    %v362 = vadd.f32 %v113, %v361
    %v363 = vpop.f32.mrb[0].mxu0
    %364 = vmatprep.mubr.f32.mxu0 0.0
    %365 = vmatmul.mubr.f32.gmra.mrb[0].mxu0 %v80
    %v366 = vpop.f32.mrb[0].mxu0
    %v367 = vadd.f32 %v113, %v366
    %v368 = vpop.f32.mrb[0].mxu0
    %369 = vmatprep.mubr.f32.mxu0 0.0
    %370 = vmatmul.mubr.f32.gmra.mrb[0].mxu0 %v81
    %v371 = vpop.f32.mrb[0].mxu0
    %v372 = vadd.f32 %v113, %v371
    %v373 = vpop.f32.mrb[0].mxu0
    %374 = vmatprep.mubr.f32.mxu0 0.0
    %375 = vmatmul.mubr.f32.gmra.mrb[0].mxu0 %v82
    %v376 = vpop.f32.mrb[0].mxu0
    %v377 = vadd.f32 %v113, %v376
    %v378 = vpop.f32.mrb[0].mxu0
    %379 = vmatprep.mubr.f32.mxu0 0.0
    %380 = vmatmul.mubr.f32.gmra.mrb[0].mxu0 %v83
    %v381 = vpop.f32.mrb[0].mxu0
    %v382 = vadd.f32 %v113, %v381
    %v383 = vpop.f32.mrb[0].mxu0
    %384 = vmatprep.mubr.f32.mxu0 0.0
    %385 = vmatmul.mubr.f32.gmra.mrb[0].mxu0 %v84
    %v386 = vpop.f32.mrb[0].mxu0
    %v387 = vadd.f32 %v113, %v386
    %v388 = vpop.f32.mrb[0].mxu0
    %389 = vmatprep.mubr.f32.mxu0 0.0
    %390 = vmatmul.mubr.f32.gmra.mrb[0].mxu0 %v85
    %v391 = vpop.f32.mrb[0].mxu0
    %v392 = vadd.f32 %v113, %v391
    %v393 = vpop.f32.mrb[0].mxu0
    %394 = vmatprep.mubr.f32.mxu0 0.0
    %395 = vmatmul.mubr.f32.gmra.mrb[0].mxu0 %v86
    %v396 = vpop.f32.mrb[0].mxu0
    %v397 = vadd.f32 %v113, %v396
    %v398 = vpop.f32.mrb[0].mxu0
    %399 = vmatprep.mubr.f32.mxu0 0.0
    %400 = vmatmul.mubr.f32.gmra.mrb[0].mxu0 %v87
    %v401 = vpop.f32.mrb[0].mxu0
    %v402 = vadd.f32 %v113, %v401
    %v403 = vpop.f32.mrb[0].mxu0
    %404 = vmatprep.mubr.f32.mxu0 0.0
    %405 = vmatmul.mubr.f32.gmra.mrb[0].mxu0 %v88
    %v406 = vpop.f32.mrb[0].mxu0
    %v407 = vadd.f32 %v113, %v406
    %v408 = vpop.f32.mrb[0].mxu0
    %409 = vmatprep.mubr.f32.mxu0 0.0
    %410 = vmatmul.mubr.f32.gmra.mrb[0].mxu0 %v89
    %v411 = vpop.f32.mrb[0].mxu0
    %v412 = vadd.f32 %v113, %v411
    %v413 = vpop.f32.mrb[0].mxu0
    %414 = vmatprep.mubr.f32.mxu0 0.0
    %415 = vmatmul.mubr.f32.gmra.mrb[0].mxu0 %v90
    %v416 = vpop.f32.mrb[0].mxu0
    %v417 = vadd.f32 %v113, %v416
    %v418 = vpop.f32.mrb[0].mxu0
    %419 = vmatprep.mubr.f32.mxu0 0.0
    %420 = vmatmul.mubr.f32.gmra.mrb[0].mxu0 %v91
    %v421 = vpop.f32.mrb[0].mxu0
    %v422 = vadd.f32 %v113, %v421
    %v423 = vpop.f32.mrb[0].mxu0
    %424 = vdwg.mxu0
    %425 = vst [vmem:[#allocation7] sm:$0xff] %v182
    %426 = vst [vmem:[#allocation7 + $0x8] sm:$0xff] %v187
    %427 = vst [vmem:[#allocation7 + $0x10] sm:$0xff] %v192
    %428 = vst [vmem:[#allocation7 + $0x18] sm:$0xff] %v197
    %429 = vst [vmem:[#allocation7 + $0x20] sm:$0xff] %v202
    %430 = vst [vmem:[#allocation7 + $0x28] sm:$0xff] %v207
    %431 = vst [vmem:[#allocation7 + $0x30] sm:$0xff] %v212
    %432 = vst [vmem:[#allocation7 + $0x38] sm:$0xff] %v217
    %433 = vst [vmem:[#allocation7 + $0x40] sm:$0xff] %v222
    %434 = vst [vmem:[#allocation7 + $0x48] sm:$0xff] %v227
    %435 = vst [vmem:[#allocation7 + $0x50] sm:$0xff] %v232
    %436 = vst [vmem:[#allocation7 + $0x58] sm:$0xff] %v237
    %437 = vst [vmem:[#allocation7 + $0x60] sm:$0xff] %v242
    %438 = vst [vmem:[#allocation7 + $0x68] sm:$0xff] %v247
    %439 = vst [vmem:[#allocation7 + $0x70] sm:$0xff] %v252
    %440 = vst [vmem:[#allocation7 + $0x78] sm:$0xff] %v257
    %441 = vst [vmem:[#allocation7 + $0x80] sm:$0xff] %v262
    %442 = vst [vmem:[#allocation7 + $0x88] sm:$0xff] %v267
    %443 = vst [vmem:[#allocation7 + $0x90] sm:$0xff] %v272
    %444 = vst [vmem:[#allocation7 + $0x98] sm:$0xff] %v277
    %445 = vst [vmem:[#allocation7 + $0xa0] sm:$0xff] %v282
    %446 = vst [vmem:[#allocation7 + $0xa8] sm:$0xff] %v287
    %447 = vst [vmem:[#allocation7 + $0xb0] sm:$0xff] %v292
    %448 = vst [vmem:[#allocation7 + $0xb8] sm:$0xff] %v297
    %449 = vst [vmem:[#allocation7 + $0xc0] sm:$0xff] %v302
    %450 = vst [vmem:[#allocation7 + $0xc8] sm:$0xff] %v307
    %451 = vst [vmem:[#allocation7 + $0xd0] sm:$0xff] %v312
    %452 = vst [vmem:[#allocation7 + $0xd8] sm:$0xff] %v317
    %453 = vst [vmem:[#allocation7 + $0xe0] sm:$0xff] %v322
    %454 = vst [vmem:[#allocation7 + $0xe8] sm:$0xff] %v327
    %455 = vst [vmem:[#allocation7 + $0xf0] sm:$0xff] %v332
    %456 = vst [vmem:[#allocation7 + $0xf8] sm:$0xff] %v337
    %457 = vst [vmem:[#allocation7 + $0x100] sm:$0xff] %v342
    %458 = vst [vmem:[#allocation7 + $0x108] sm:$0xff] %v347
    %459 = vst [vmem:[#allocation7 + $0x110] sm:$0xff] %v352
    %460 = vst [vmem:[#allocation7 + $0x118] sm:$0xff] %v357
    %461 = vst [vmem:[#allocation7 + $0x120] sm:$0xff] %v362
    %462 = vst [vmem:[#allocation7 + $0x128] sm:$0xff] %v367
    %463 = vst [vmem:[#allocation7 + $0x130] sm:$0xff] %v372
    %464 = vst [vmem:[#allocation7 + $0x138] sm:$0xff] %v377
    %465 = vst [vmem:[#allocation7 + $0x140] sm:$0xff] %v382
    %466 = vst [vmem:[#allocation7 + $0x148] sm:$0xff] %v387
    %467 = vst [vmem:[#allocation7 + $0x150] sm:$0xff] %v392
    %468 = vst [vmem:[#allocation7 + $0x158] sm:$0xff] %v397
    %469 = vst [vmem:[#allocation7 + $0x160] sm:$0xff] %v402
    %470 = vst [vmem:[#allocation7 + $0x168] sm:$0xff] %v407
    %471 = vst [vmem:[#allocation7 + $0x170] sm:$0xff] %v412
    %472 = vst [vmem:[#allocation7 + $0x178] sm:$0xff] %v417
    %473 = vst [vmem:[#allocation7 + $0x180] sm:$0xff] %v422
    // Predicated region
    $region22: #{tpu_custom_call.1} parent=1 // pred_check
      _
    $region23: #{tpu_custom_call.1} parent=1 // pred_check_branch
      %475 = sbr.rel (0) target = $region25
    $region24: #{tpu_custom_call.1} parent=1 // pred_region
      %s477 = ssub.s32 6272, 6272
      %478 = vsyncadd [#allocation4], %s477
      %s479 = sshll.u32 [#allocation7], 4
      %s480 = int_to_ptr.vmem [resolvable:$true] %s479
      %485 = dma.vmem_to_hbm [thread:$0]  %s480, 6272, %s3, [#allocation4], 128, 128, 8
    $region25: #{tpu_custom_call.1} parent=1 // pred_fallthru
      _
    // Predicated region
    $region26: #{tpu_custom_call.1} parent=1 // pred_check
      _
    $region27: #{tpu_custom_call.1} parent=1 // pred_check_branch
      %487 = sbr.rel (0) target = $region29
    $region28: #{tpu_custom_call.1} parent=1 // pred_region
      %488 = dma.done [#allocation4], 6272
    $region29: #{tpu_custom_call.1} parent=1 // pred_fallthru
      _
    %489 = vsyncpa [#allocation3], 1
    %490 = vsyncpa [#allocation6], 1
    %491 = vsyncpa [#allocation4], 1

</llo_original>
